<compile_context>
chip_gen: v5e
topology: v5e:2x2
jax: 0.10.0
libtpu: 0.0.40
codegen_flags: <defaults>
</compile_context>

<pallas_src>
import functools

import jax
import jax.numpy as jnp
from jax.experimental import pallas as pl
from jax.experimental.pallas import tpu as pltpu


_LANES = 128
_SMALL_BYTES = 256 * 1024              # below this, a fused XLA reduce wins
_TILE_BYTES_BUDGET = 2 * 1024 * 1024   # target input bytes per pipeline tile


def _sublane_multiple(itemsize):
    # sublane packing granularity per element width (f32 / bf16 / int8-fp8)
    return {4: 8, 2: 16, 1: 32}.get(itemsize, 8)


def _round_up(v, m):
    return (v + m - 1) // m * m


def _pool_kernel(x_ref, o_ref, *, pool_operation, groups, feat, inv_t):
    # x_ref block: (TM, Tc, groups*feat)   (groups*feat lane-dense when packed)
    # o_ref block: (TM, feat)
    tc = x_ref.shape[1]
    if pool_operation == "max":
        acc = x_ref[:, 0, :]
        for t in range(1, tc):                       # VPU elementwise, unrolled
            acc = jnp.maximum(acc, x_ref[:, t, :])
        out = acc[:, 0:feat]
        for g in range(1, groups):                   # in-lane group reduce
            out = jnp.maximum(out, acc[:, g * feat:(g + 1) * feat])
        o_ref[...] = out.astype(o_ref.dtype)
    else:  # "average": accumulate in f32 slice-by-slice (no full f32 copy)
        acc = x_ref[:, 0, :].astype(jnp.float32)
        for t in range(1, tc):
            acc = acc + x_ref[:, t, :].astype(jnp.float32)
        out = acc[:, 0:feat]
        for g in range(1, groups):
            out = out + acc[:, g * feat:(g + 1) * feat]
        o_ref[...] = (out * jnp.float32(inv_t)).astype(o_ref.dtype)


def pool_reducer(x, pool_operation="max", *, force_pallas=False):
    """Pallas implementation of PoolReducer.forward (reduce over axis 2)."""
    if pool_operation not in ("max", "average"):
        raise ValueError('pool_operation must be in ["max","average"]')
    if x.ndim != 4:
        raise ValueError("expected a 4-D input of shape (B, C, T, F)")
    if pool_operation == "average" and not jnp.issubdtype(x.dtype, jnp.floating):
        # torch.mean raises on integer tensors; keep parity.
        raise TypeError("'average' requires a floating-point input")

    B, C, T, F = x.shape
    R = B * C
    itemsize = jnp.dtype(x.dtype).itemsize

    # Small-problem fallback: Pallas launch + per-step overhead dominates.
    if not force_pallas and x.size * itemsize < _SMALL_BYTES:
        return jnp.max(x, axis=2) if pool_operation == "max" else jnp.mean(x, axis=2)

    # Lane packing: fold G temporal steps onto the lane axis when F is small.
    if F < _LANES and _LANES % F == 0 and T % (_LANES // F) == 0:
        G = _LANES // F
    else:
        G = 1
    Tc = T // G
    Fp = G * F

    xr = x.reshape(R, Tc, Fp)  # contiguous -> free reshape outside the kernel

    # Row-tile size: multiple of sublane granularity, sized to the VMEM budget.
    sub = _sublane_multiple(itemsize)
    bytes_per_row = T * F * itemsize
    tm = max(sub, (_TILE_BYTES_BUDGET // bytes_per_row) // sub * sub)
    tm = min(tm, _round_up(R, sub))
    grid = (pl.cdiv(R, tm),)

    kernel = functools.partial(
        _pool_kernel,
        pool_operation=pool_operation,
        groups=G,
        feat=F,
        inv_t=1.0 / T,
    )

    out = pl.pallas_call(
        kernel,
        out_shape=jax.ShapeDtypeStruct((R, F), x.dtype),
        grid_spec=pltpu.PrefetchScalarGridSpec(
            num_scalar_prefetch=0,
            grid=grid,
            in_specs=[pl.BlockSpec((tm, Tc, Fp), lambda i: (i, 0, 0))],
            out_specs=pl.BlockSpec((tm, F), lambda i: (i, 0)),
        ),
        compiler_params=pltpu.CompilerParams(
            dimension_semantics=("parallel",),
            vmem_limit_bytes=32 * 1024 * 1024,
        ),
    )(xr)
    return out.reshape(B, C, F)


if __name__ == "__main__":
    key = jax.random.PRNGKey(0)
    k1, k2 = jax.random.split(key)

    # Shapes consistent with the module: (batch, channels, temporal_context, features)
    B, C, T, F = 2, 4, 8, 32
    x = jax.random.normal(k1, (B, C, T, F), dtype=jnp.float32)

    # Pallas path (packed: 4 temporal steps folded onto the 128-lane axis).
    out_max = jax.block_until_ready(pool_reducer(x, "max", force_pallas=True))
    out_avg = jax.block_until_ready(pool_reducer(x, "average", force_pallas=True))
    ref_max = jnp.max(x, axis=2)
    ref_avg = jnp.mean(x, axis=2)
    assert out_max.shape == (B, C, F) and out_avg.shape == (B, C, F)
    assert jnp.array_equal(out_max, ref_max), "max pool mismatch"
    assert jnp.allclose(out_avg, ref_avg, atol=1e-6), "average pool mismatch"

    # Un-packed path (F does not divide 128) with a ragged row tile.
    B2, C2, T2, F2 = 3, 5, 7, 48
    y = jax.random.normal(k2, (B2, C2, T2, F2), dtype=jnp.float32)
    out2_max = jax.block_until_ready(pool_reducer(y, "max", force_pallas=True))
    out2_avg = jax.block_until_ready(pool_reducer(y, "average", force_pallas=True))
    assert jnp.array_equal(out2_max, jnp.max(y, axis=2)), "max pool mismatch (unpacked)"
    assert jnp.allclose(out2_avg, jnp.mean(y, axis=2), atol=1e-6), "avg pool mismatch (unpacked)"

    # bf16 max (exact: max picks one of the inputs).
    xb = x.astype(jnp.bfloat16)
    out_b = jax.block_until_ready(pool_reducer(xb, "max", force_pallas=True))
    assert jnp.array_equal(out_b, jnp.max(xb, axis=2)), "bf16 max pool mismatch"

    # Small-problem fallback path (default dispatch, no Pallas).
    out_fb = jax.block_until_ready(pool_reducer(x, "max"))
    assert jnp.array_equal(out_fb, ref_max), "fallback mismatch"

    print("KERNEL_OK")
</pallas_src>

<mosaic_0001>
module attributes {stable_mosaic.version = 11 : i64} {
  func.func @_pool_kernel(%arg0: i32, %arg1: memref<8x2x128xf32, #tpu.memory_space<vmem>>, %arg2: memref<8x32xf32, #tpu.memory_space<vmem>>) attributes {dimension_semantics = [#tpu.dimension_semantics<parallel>], iteration_bounds = array<i64: 1>, scalar_prefetch = 0 : i64, scratch_operands = 0 : i64, tpu.core_type = #tpu.core_type<tc>, window_params = [{transform_indices = @transform_0, window_bounds = array<i64: 8, 2, 128>}, {transform_indices = @transform_1, window_bounds = array<i64: 8, 32>}]} {
    %c0 = arith.constant 0 : index
    %c0_0 = arith.constant 0 : index
    %c0_1 = arith.constant 0 : index
    %0 = vector.load %arg1[%c0, %c0_0, %c0_1] : memref<8x2x128xf32, #tpu.memory_space<vmem>>, vector<8x1x128xf32>
    %1 = vector.shape_cast %0 : vector<8x1x128xf32> to vector<8x128xf32>
    %c0_2 = arith.constant 0 : index
    %c1 = arith.constant 1 : index
    %c0_3 = arith.constant 0 : index
    %2 = vector.load %arg1[%c0_2, %c1, %c0_3] : memref<8x2x128xf32, #tpu.memory_space<vmem>>, vector<8x1x128xf32>
    %3 = vector.shape_cast %2 : vector<8x1x128xf32> to vector<8x128xf32>
    %4 = arith.maximumf %1, %3 : vector<8x128xf32>
    %5 = vector.extract_strided_slice %4 {offsets = [0, 0], sizes = [8, 32], strides = [1, 1]} : vector<8x128xf32> to vector<8x32xf32>
    %6 = vector.extract_strided_slice %4 {offsets = [0, 32], sizes = [8, 32], strides = [1, 1]} : vector<8x128xf32> to vector<8x32xf32>
    %7 = arith.maximumf %5, %6 : vector<8x32xf32>
    %8 = vector.extract_strided_slice %4 {offsets = [0, 64], sizes = [8, 32], strides = [1, 1]} : vector<8x128xf32> to vector<8x32xf32>
    %9 = arith.maximumf %7, %8 : vector<8x32xf32>
    %10 = vector.extract_strided_slice %4 {offsets = [0, 96], sizes = [8, 32], strides = [1, 1]} : vector<8x128xf32> to vector<8x32xf32>
    %11 = arith.maximumf %9, %10 : vector<8x32xf32>
    %c0_4 = arith.constant 0 : index
    %c0_5 = arith.constant 0 : index
    %12 = vector.load %arg2[%c0_4, %c0_5] : memref<8x32xf32, #tpu.memory_space<vmem>>, vector<8x32xf32>
    tpu.vector_store %arg2[%c0_4, %c0_5], %11 {strides = array<i32>} : memref<8x32xf32, #tpu.memory_space<vmem>>, vector<8x32xf32>,
    return
  }
  func.func @transform_0(%arg0: i32) -> (i32, i32, i32) {
    %c0_i32 = arith.constant 0 : i32
    %c0_i32_0 = arith.constant 0 : i32
    %c0_i32_1 = arith.constant 0 : i32
    return %arg0, %c0_i32, %c0_i32_0 : i32, i32, i32
  }
  func.func @transform_1(%arg0: i32) -> (i32, i32) {
    %c0_i32 = arith.constant 0 : i32
    %c0_i32_0 = arith.constant 0 : i32
    return %arg0, %c0_i32 : i32, i32
  }
}

</mosaic_0001>

<llo_original>
// kernel: tpu_custom_call.1
$region0: #{tpu_custom_call.1}
  #allocation0 [shape = 'u32[]', space=smem, size = 0x4, offset = 0x4, fixed_abs, tag = 'smem constant byte address 0x4 - core index']
  #allocation1 [shape = 'u32[72,128]{1,0:T(1,128)}', space=vmem, size = 0x9000, scoped, tag = 'internal scratch']
  %s0 = inlined_call_operand.hbm [shape: f32[8,2,128], index: 0, kind: input, shape index: {}]
  %s1 = inlined_call_operand.hbm [shape: f32[8,32], index: 1, kind: output, shape index: {}]
  %s2 = sld [smem:[#allocation0]]
  $region18: #{tpu_custom_call.1} parent=0
    _
  %s4 = ssub.s32 1, %s2
  %s5 = scalar_select 0, %s4, %s2
  $region1: #{tpu_custom_call.1} parent=0
    #allocation2 [shape = 'u8[8192]{0}', space=vmem, size = 0x2000, scoped, tag = 'input window, operand 0, single buffered']
    #allocation3 [shape = 's32[1]{0}', space=sflag, size = 0x4, scoped, tag = 'scoped memory for tpu_custom_call.1']
    #allocation4 [shape = 's32[1]{0}', space=sflag, size = 0x4, scoped, tag = 'scoped memory for tpu_custom_call.1']
    #allocation5 [shape = 'u8[4096]{0}', space=vmem, size = 0x1000, scoped, tag = 'output window, operand 0, single buffered']
    %6 = vsyncpa [#allocation3], 0
    %7 = vsyncpa [#allocation4], 0
    // Predicated region
    $region2: #{tpu_custom_call.1} parent=1 // pred_check
      _
    $region3: #{tpu_custom_call.1} parent=1 // pred_check_branch
      %9 = sbr.rel (0) target = $region5
    $region4: #{tpu_custom_call.1} parent=1 // pred_region
      %11 = vsyncadd [#allocation3], 0
      %s12 = sshll.u32 %s0, 4
      %s13 = int_to_ptr.hbm [resolvable:$true] %s12
      %s14 = sshll.u32 [#allocation2], 4
      %s15 = int_to_ptr.vmem [resolvable:$true] %s14
      %20 = dma.hbm_to_vmem [thread:$0]  %s13, 256, %s15, [#allocation3], 32, 32, 2
    $region5: #{tpu_custom_call.1} parent=1 // pred_fallthru
      _
    // Predicated region
    $region6: #{tpu_custom_call.1} parent=1 // pred_check
      _
    $region7: #{tpu_custom_call.1} parent=1 // pred_check_branch
      %22 = sbr.rel (0) target = $region9
    $region8: #{tpu_custom_call.1} parent=1 // pred_region
      %24 = dma.done [#allocation3], 256
    $region9: #{tpu_custom_call.1} parent=1 // pred_fallthru
      _
    %v25 = vld [vmem:[#allocation2] sm:$0x1]
    %v26 = vld [vmem:[#allocation2 + $0x2] sm:$0x1]
    %v27 = vld [vmem:[#allocation2 + $0x4] sm:$0x1]
    %v28 = vld [vmem:[#allocation2 + $0x6] sm:$0x1]
    %v29 = vld [vmem:[#allocation2 + $0x8] sm:$0x1]
    %v30 = vld [vmem:[#allocation2 + $0xa] sm:$0x1]
    %v31 = vld [vmem:[#allocation2 + $0xc] sm:$0x1]
    %v32 = vld [vmem:[#allocation2 + $0xe] sm:$0x1]
    %v33 = vld [vmem:[#allocation2 + $0x1] sm:$0x1]
    %v34 = vld [vmem:[#allocation2 + $0x3] sm:$0x1]
    %v35 = vld [vmem:[#allocation2 + $0x5] sm:$0x1]
    %v36 = vld [vmem:[#allocation2 + $0x7] sm:$0x1]
    %v37 = vld [vmem:[#allocation2 + $0x9] sm:$0x1]
    %v38 = vld [vmem:[#allocation2 + $0xb] sm:$0x1]
    %v39 = vld [vmem:[#allocation2 + $0xd] sm:$0x1]
    %v40 = vld [vmem:[#allocation2 + $0xf] sm:$0x1]
    %v41 = vmax.f32 %v25, %v33
    %v42 = vmax.f32 %v26, %v34
    %v43 = vmax.f32 %v27, %v35
    %v44 = vmax.f32 %v28, %v36
    %v45 = vmax.f32 %v29, %v37
    %v46 = vmax.f32 %v30, %v38
    %v47 = vmax.f32 %v31, %v39
    %v48 = vmax.f32 %v32, %v40
    %57 = vrot.lane.b32.xlu0 %v41, 96
    %v58 = vpop.permute.xlu0 %57
    %59 = vrot.lane.b32.xlu0 %v42, 96
    %v60 = vpop.permute.xlu0 %59
    %61 = vrot.lane.b32.xlu0 %v43, 96
    %v62 = vpop.permute.xlu0 %61
    %63 = vrot.lane.b32.xlu0 %v44, 96
    %v64 = vpop.permute.xlu0 %63
    %65 = vrot.lane.b32.xlu0 %v45, 96
    %v66 = vpop.permute.xlu0 %65
    %67 = vrot.lane.b32.xlu0 %v46, 96
    %v68 = vpop.permute.xlu0 %67
    %69 = vrot.lane.b32.xlu0 %v47, 96
    %v70 = vpop.permute.xlu0 %69
    %71 = vrot.lane.b32.xlu0 %v48, 96
    %v72 = vpop.permute.xlu0 %71
    %v81 = vmax.f32 %v41, %v58
    %v82 = vmax.f32 %v42, %v60
    %v83 = vmax.f32 %v43, %v62
    %v84 = vmax.f32 %v44, %v64
    %v85 = vmax.f32 %v45, %v66
    %v86 = vmax.f32 %v46, %v68
    %v87 = vmax.f32 %v47, %v70
    %v88 = vmax.f32 %v48, %v72
    %89 = vrot.lane.b32.xlu0 %v41, 64
    %v90 = vpop.permute.xlu0 %89
    %91 = vrot.lane.b32.xlu0 %v42, 64
    %v92 = vpop.permute.xlu0 %91
    %93 = vrot.lane.b32.xlu0 %v43, 64
    %v94 = vpop.permute.xlu0 %93
    %95 = vrot.lane.b32.xlu0 %v44, 64
    %v96 = vpop.permute.xlu0 %95
    %97 = vrot.lane.b32.xlu0 %v45, 64
    %v98 = vpop.permute.xlu0 %97
    %99 = vrot.lane.b32.xlu0 %v46, 64
    %v100 = vpop.permute.xlu0 %99
    %101 = vrot.lane.b32.xlu0 %v47, 64
    %v102 = vpop.permute.xlu0 %101
    %103 = vrot.lane.b32.xlu0 %v48, 64
    %v104 = vpop.permute.xlu0 %103
    %v113 = vmax.f32 %v81, %v90
    %v114 = vmax.f32 %v82, %v92
    %v115 = vmax.f32 %v83, %v94
    %v116 = vmax.f32 %v84, %v96
    %v117 = vmax.f32 %v85, %v98
    %v118 = vmax.f32 %v86, %v100
    %v119 = vmax.f32 %v87, %v102
    %v120 = vmax.f32 %v88, %v104
    %121 = vrot.lane.b32.xlu0 %v41, 32
    %v122 = vpop.permute.xlu0 %121
    %123 = vrot.lane.b32.xlu0 %v42, 32
    %v124 = vpop.permute.xlu0 %123
    %125 = vrot.lane.b32.xlu0 %v43, 32
    %v126 = vpop.permute.xlu0 %125
    %127 = vrot.lane.b32.xlu0 %v44, 32
    %v128 = vpop.permute.xlu0 %127
    %129 = vrot.lane.b32.xlu0 %v45, 32
    %v130 = vpop.permute.xlu0 %129
    %131 = vrot.lane.b32.xlu0 %v46, 32
    %v132 = vpop.permute.xlu0 %131
    %133 = vrot.lane.b32.xlu0 %v47, 32
    %v134 = vpop.permute.xlu0 %133
    %135 = vrot.lane.b32.xlu0 %v48, 32
    %v136 = vpop.permute.xlu0 %135
    %v145 = vmax.f32 %v113, %v122
    %v146 = vmax.f32 %v114, %v124
    %v147 = vmax.f32 %v115, %v126
    %v148 = vmax.f32 %v116, %v128
    %v149 = vmax.f32 %v117, %v130
    %v150 = vmax.f32 %v118, %v132
    %v151 = vmax.f32 %v119, %v134
    %v152 = vmax.f32 %v120, %v136
    %v161 = vrot.slane %v146, 7
    %vm162 = vcmask 1041409
    %v163 = vsel %vm162, %v161, %v145
    %v164 = vrot.slane %v147, 6
    %vm165 = vcmask 1042434
    %v166 = vsel %vm165, %v164, %v163
    %v167 = vrot.slane %v148, 5
    %vm168 = vcmask 1043459
    %v169 = vsel %vm168, %v167, %v166
    %v170 = vrot.slane %v149, 4
    %vm171 = vcmask 1044484
    %v172 = vsel %vm171, %v170, %v169
    %v173 = vrot.slane %v150, 3
    %vm174 = vcmask 1045509
    %v175 = vsel %vm174, %v173, %v172
    %v176 = vrot.slane %v151, 2
    %vm177 = vcmask 1046534
    %v178 = vsel %vm177, %v176, %v175
    %v179 = vrot.slane %v152, 1
    %vm180 = vcmask 1047559
    %v181 = vsel %vm180, %v179, %v178
    %vm183 = vcmask 261120
    %184 = vst.msk [vmem:[#allocation5] sm:$0xff] %vm183, %v181
    // Predicated region
    $region10: #{tpu_custom_call.1} parent=1 // pred_check
      _
    $region11: #{tpu_custom_call.1} parent=1 // pred_check_branch
      %186 = sbr.rel (0) target = $region13
    $region12: #{tpu_custom_call.1} parent=1 // pred_region
      %188 = vsyncadd [#allocation4], 0
      %s190 = sshll.u32 [#allocation5], 4
      %s191 = int_to_ptr.vmem [resolvable:$true] %s190
      %s192 = sshll.u32 %s1, 4
      %s193 = int_to_ptr.hbm [resolvable:$true] %s192
      %195 = dma.vmem_to_hbm [thread:$0]  %s191, 128, %s193, [#allocation4]
    $region13: #{tpu_custom_call.1} parent=1 // pred_fallthru
      _
    // Predicated region
    $region14: #{tpu_custom_call.1} parent=1 // pred_check
      _
    $region15: #{tpu_custom_call.1} parent=1 // pred_check_branch
      %197 = sbr.rel (0) target = $region17
    $region16: #{tpu_custom_call.1} parent=1 // pred_region
      %199 = dma.done [#allocation4], 128
    $region17: #{tpu_custom_call.1} parent=1 // pred_fallthru
      _
    %200 = vsyncpa [#allocation3], 1
    %201 = vsyncpa [#allocation4], 1

</llo_original>
